<compile_context>
chip_gen: v6e
topology: v6e:2x2x1
jax: 0.10.0
libtpu: 0.0.40
codegen_flags: <defaults>
</compile_context>

<pallas_src>
import functools

import jax
import jax.numpy as jnp
import numpy as np
from jax.experimental import pallas as pl
from jax.experimental.pallas import tpu as pltpu


# ----------------------------- Pallas kernels -------------------------------
def _crop_resize_h_first_kernel(wy_ref, wxtb_ref, src_ref, out_ref, tmp_ref):
    """H-resize first, then block-diag W-resize.

    src_ref : (Hs, B*Ws)   planes packed along the LANE axis
    wy_ref  : (Hd, Hs)     row-resize weights (grid-invariant)
    wxtb_ref: (B*Ws, B*Wd) kron(I_B, Wx^T) column-resize weights (grid-invariant)
    out_ref : (Hd, B*Wd)   lane-dense output slab, one unmasked store
    tmp_ref : (Hd, B*Ws)   VMEM scratch for the intermediate
    Both resizes are single lane-dense MXU matmuls (no per-plane loop).
    """
    tmp_ref[...] = jnp.dot(wy_ref[...], src_ref[...],
                           preferred_element_type=jnp.float32
                           ).astype(tmp_ref.dtype)
    out_ref[...] = jnp.dot(tmp_ref[...], wxtb_ref[...],
                           preferred_element_type=jnp.float32
                           ).astype(out_ref.dtype)


def _crop_resize_w_first_kernel(wy_ref, wxtb_ref, src_ref, out_ref, tmp_ref):
    """Block-diag W-resize first, then H-resize.  tmp_ref: (Hs, B*Wd)."""
    tmp_ref[...] = jnp.dot(src_ref[...], wxtb_ref[...],
                           preferred_element_type=jnp.float32
                           ).astype(tmp_ref.dtype)
    out_ref[...] = jnp.dot(wy_ref[...], tmp_ref[...],
                           preferred_element_type=jnp.float32
                           ).astype(out_ref.dtype)


# ------------------------------ tiling helpers -------------------------------
def _vmem_capacity_bytes():
    """Per-core VMEM derived from the device (64 MiB v7x, 128 MiB v5e/v6e)."""
    try:
        return int(pltpu.get_tpu_info().vmem_capacity_bytes)
    except Exception:
        # Narrow hardware-query fallback only (never re-runs the pallas_call):
        # assume the smallest real part (v7x, 64 MiB) so sizing stays safe.
        return 64 << 20


def _per_step_vmem_bytes(b, hs, ws, hd, wd, itemsize, out_itemsize):
    blocks = 2 * b * (hs * ws * itemsize + hd * wd * out_itemsize)  # dbl-buffered src/out
    weights = 2 * (hd * hs + (b * ws) * (b * wd)) * itemsize        # dbl-buffered weights
    scratch = b * max(hd * ws, hs * wd) * itemsize                  # intermediate scratch
    return blocks + weights + scratch


def _choose_plane_batch(nc, hs, ws, hd, wd, itemsize, out_itemsize, vmem_cap):
    """Planes per grid step.  With planes packed along the lane axis a block is
    (8,128)-legal iff it spans the full lane extent or its width is a multiple
    of 128.  Prefer >= 4 grid steps (>= 2 per v7x TensorCore) so DMAs pipeline;
    otherwise take the largest batch fitting ~45% of device VMEM (larger on the
    128 MiB v5e/v6e parts than on v7x's 64 MiB)."""
    budget = max(8 << 20, int(0.45 * vmem_cap))
    size = lambda d: _per_step_vmem_bytes(d, hs, ws, hd, wd, itemsize, out_itemsize)
    divisors = [d for d in range(1, nc + 1) if nc % d == 0]
    aligned = [d for d in divisors
               if d == nc or ((d * ws) % 128 == 0 and (d * wd) % 128 == 0)]
    fitting = [d for d in aligned if size(d) <= budget]
    pool = fitting if fitting else [min(aligned, key=size)]
    deep = [d for d in pool if (nc // d) >= 4 and (nc // d) % 2 == 0]
    return max(deep) if deep else max(pool)


# ------------------------------ pallas wrapper --------------------------------
def crop_and_resize_pallas(src_pk, wy, wxt, *, nc, hs, ws, hd, wd, out_dtype):
    """src_pk: (Hs, NC*Ws) lane-packed planes; wy: (Hd, Hs); wxt: (Ws, Wd)
    -> (Hd, NC*Wd) lane-packed resized planes."""
    assert src_pk.shape == (hs, nc * ws), (src_pk.shape, nc, hs, ws)
    itemsize = int(np.dtype(src_pk.dtype).itemsize)
    out_itemsize = int(np.dtype(out_dtype).itemsize)

    vmem_cap = _vmem_capacity_bytes()
    b = _choose_plane_batch(nc, hs, ws, hd, wd, itemsize, out_itemsize, vmem_cap)
    grid_len = nc // b
    bws, bwd = b * ws, b * wd

    # Block-diagonal column-resize operator: ONE lane-dense MXU matmul applies
    # Wx^T independently to each of the B lane-packed planes (same matrix for
    # every plane group, so it is grid-invariant).
    # TODO(synk): for wide images (Ws, Wd >= 128) a sublane-stacked path without
    # the block-diagonal blow-up would use fewer MXU passes; not needed here.
    wxt_block = jnp.kron(jnp.eye(b, dtype=wxt.dtype), wxt)       # (B*Ws, B*Wd)

    # Contraction order: both orders are single lane-dense matmuls, so the MXU
    # FLOP count (including the block-diagonal blow-up) decides.
    flops_h_first = 2 * (hd * hs * bws + hd * bws * bwd)
    flops_w_first = 2 * (hs * bws * bwd + hd * hs * bwd)
    if flops_h_first <= flops_w_first:
        kernel = _crop_resize_h_first_kernel
        tmp_shape = (hd, bws)
        step_flops = flops_h_first
    else:
        kernel = _crop_resize_w_first_kernel
        tmp_shape = (hs, bwd)
        step_flops = flops_w_first

    per_step = _per_step_vmem_bytes(b, hs, ws, hd, wd, itemsize, out_itemsize)
    vmem_limit = int(min(vmem_cap - (4 << 20),              # headroom vs capacity
                         max(16 << 20, 2 * per_step)))

    cost = pl.CostEstimate(
        flops=grid_len * step_flops,
        transcendentals=0,
        bytes_accessed=itemsize * (nc * hs * ws + hd * hs + bws * bwd)
        + out_itemsize * nc * hd * wd)

    grid_spec = pltpu.PrefetchScalarGridSpec(
        num_scalar_prefetch=0,
        grid=(grid_len,),
        in_specs=[
            pl.BlockSpec((hd, hs), lambda i: (0, 0)),        # Wy (grid-invariant)
            pl.BlockSpec((bws, bwd), lambda i: (0, 0)),      # kron(I_B, Wx^T)
            pl.BlockSpec((hs, bws), lambda i: (0, i)),       # src plane group
        ],
        out_specs=pl.BlockSpec((hd, bwd), lambda i: (0, i)),
        scratch_shapes=[pltpu.VMEM(tmp_shape, src_pk.dtype)],
    )
    return pl.pallas_call(
        kernel,
        out_shape=jax.ShapeDtypeStruct((hd, nc * wd), out_dtype),
        grid_spec=grid_spec,
        compiler_params=pltpu.CompilerParams(
            dimension_semantics=("parallel",),
            vmem_limit_bytes=vmem_limit),
        cost_estimate=cost,
    )(wy, wxt_block, src_pk)


# ------------------------------- JAX glue -----------------------------------
def _bilinear_weight_matrix(start, stop, out_size, in_size):
    """W (out_size, in_size) s.t. (W @ line) bilinearly samples `line` at
    coords start + k*(stop-start)/(out_size-1), align_corners=True, built with
    a vectorized one-hot (no scatter-add).  Indices clamped to valid range."""
    k = jnp.arange(out_size, dtype=jnp.float32)
    denom = float(max(out_size - 1, 1))              # guard out_size == 1
    coord = start + k * (stop - start) / denom
    i0f = jnp.floor(coord)
    frac = coord - i0f
    i0 = jnp.clip(i0f.astype(jnp.int32), 0, in_size - 1)
    i1 = jnp.clip(i0 + 1, 0, in_size - 1)
    cols = jnp.arange(in_size, dtype=jnp.int32)[None, :]
    w = ((cols == i0[:, None]).astype(jnp.float32) * (1.0 - frac)[:, None]
         + (cols == i1[:, None]).astype(jnp.float32) * frac[:, None])
    # TODO(synk): kornia zero-pads samples that fall outside the source image;
    # here indices are clamped (exact match whenever the box lies inside).
    return w


@functools.partial(jax.jit, static_argnames=("compute_dtype",))
def tv_denoise_forward(src_img, dst_img, mem, xyxy, *, compute_dtype=jnp.float32):
    """Mirrors TVDenoise.forward: crop src_img at box(mem@xyxy), resize to
    dst_img.shape[-2:].  Inputs NCHW.  compute_dtype=jnp.bfloat16 is the fast
    MXU path on v6e/v7x (f32 accumulation kept, ~1e-3 level error)."""
    N, C, Hs, Ws = src_img.shape
    Hd, Wd = int(dst_img.shape[-2]), int(dst_img.shape[-1])

    boxes = jnp.matmul(mem, xyxy).reshape(1, 4, 2)
    # TODO(synk): assumes the axis-aligned corner ordering produced by `mem`
    # ([[x1,y1],[x2,y1],[x2,y2],[x1,y2]]); a rotated/reordered box would break
    # the separability assumption rather than erroring.
    x1, y1 = boxes[0, 0, 0], boxes[0, 0, 1]
    x2, y2 = boxes[0, 2, 0], boxes[0, 2, 1]

    wy = _bilinear_weight_matrix(y1, y2, Hd, Hs).astype(compute_dtype)       # (Hd, Hs)
    wxt = _bilinear_weight_matrix(x1, x2, Wd, Ws).T.astype(compute_dtype)    # (Ws, Wd)

    # Lane-packed slab: planes along the LANE axis -> (Hs, NC*Ws).  Cheap
    # wrapper-side layout plumbing that makes both kernel matmuls and the
    # output store lane-dense.
    src_pk = src_img.transpose(2, 0, 1, 3).reshape(Hs, N * C * Ws).astype(compute_dtype)

    out_pk = crop_and_resize_pallas(src_pk, wy, wxt, nc=N * C, hs=Hs, ws=Ws,
                                    hd=Hd, wd=Wd, out_dtype=src_img.dtype)
    return out_pk.reshape(Hd, N, C, Wd).transpose(1, 2, 0, 3)


# --------------------------------- main --------------------------------------
if __name__ == "__main__":
    key = jax.random.PRNGKey(0)
    k_src, _ = jax.random.split(key)

    N, C = 2, 3
    Hs, Ws = 16, 16
    src_img = jax.random.uniform(k_src, (N, C, Hs, Ws), dtype=jnp.float32)

    # Deterministic parameters (shapes match the module; values scaled to the
    # small synthetic image instead of the 713x713 original).
    mem = jnp.array(
        [[1.0, 0, 0, 0],
         [0, 1, 0, 0],
         [0, 0, 1, 0],
         [0, 1, 0, 0],
         [0, 0, 1, 0],
         [0, 0, 0, 1],
         [1.0, 0, 0, 0],
         [0, 0, 0, 1]], dtype=jnp.float32)
    xyxy = jnp.array([[1.0], [2.0], [13.0], [12.0]], dtype=jnp.float32)

    boxes = jnp.matmul(mem, xyxy).reshape(1, 4, 2)
    x1, y1 = boxes[0, 0, 0], boxes[0, 0, 1]
    x2, y2 = boxes[0, 2, 0], boxes[0, 2, 1]

    # (8,8)/(4,8) exercise the H-first order; (32,8) (H upsample) the W-first
    # order (both single lane-dense matmul kernels).
    for (Hd, Wd) in [(8, 8), (4, 8), (32, 8)]:
        dst_img = jnp.zeros((N, C, Hd, Wd), jnp.float32)
        out = jax.block_until_ready(
            tv_denoise_forward(src_img, dst_img, mem, xyxy,
                               compute_dtype=jnp.float32))
        assert out.shape == (N, C, Hd, Wd), out.shape

        # Pure-JAX reference of the same separable bilinear crop+resize.
        wy_ref = _bilinear_weight_matrix(y1, y2, Hd, Hs)
        wx_ref = _bilinear_weight_matrix(x1, x2, Wd, Ws)
        ref = jnp.einsum("hs,ncsw,dw->nchd", wy_ref, src_img, wx_ref)
        assert jnp.allclose(out, ref, atol=1e-5, rtol=1e-5)

    # bf16 fast path (recommended on v6e/v7x); tolerance loosened accordingly.
    Hd, Wd = 8, 8
    dst_img = jnp.zeros((N, C, Hd, Wd), jnp.float32)
    out_bf16 = jax.block_until_ready(
        tv_denoise_forward(src_img, dst_img, mem, xyxy,
                           compute_dtype=jnp.bfloat16))
    wy_ref = _bilinear_weight_matrix(y1, y2, Hd, Hs)
    wx_ref = _bilinear_weight_matrix(x1, x2, Wd, Ws)
    ref = jnp.einsum("hs,ncsw,dw->nchd", wy_ref, src_img, wx_ref)
    assert jnp.allclose(out_bf16, ref, atol=3e-2, rtol=3e-2)

    print("KERNEL_OK")
</pallas_src>

<mosaic_0001>
module attributes {stable_mosaic.version = 11 : i64} {
  func.func @_crop_resize_h_first_kernel(%arg0: i32, %arg1: memref<8x16xf32, #tpu.memory_space<vmem>>, %arg2: memref<96x48xf32, #tpu.memory_space<vmem>>, %arg3: memref<16x96xf32, #tpu.memory_space<vmem>>, %arg4: memref<8x48xf32, #tpu.memory_space<vmem>>, %arg5: memref<8x96xf32, #tpu.memory_space<vmem>>) attributes {dimension_semantics = [#tpu.dimension_semantics<parallel>], iteration_bounds = array<i64: 1>, scalar_prefetch = 0 : i64, scratch_operands = 1 : i64, tpu.core_type = #tpu.core_type<tc>, window_params = [{pipeline_mode = #tpu.pipeline_mode<synchronous>, transform_indices = @transform_0, window_bounds = array<i64: 8, 16>}, {pipeline_mode = #tpu.pipeline_mode<synchronous>, transform_indices = @transform_1, window_bounds = array<i64: 96, 48>}, {transform_indices = @transform_2, window_bounds = array<i64: 16, 96>}, {transform_indices = @transform_3, window_bounds = array<i64: 8, 48>}]} {
    %c0 = arith.constant 0 : index
    %c0_0 = arith.constant 0 : index
    %0 = vector.load %arg1[%c0, %c0_0] : memref<8x16xf32, #tpu.memory_space<vmem>>, vector<8x16xf32>
    %c0_1 = arith.constant 0 : index
    %c0_2 = arith.constant 0 : index
    %1 = vector.load %arg3[%c0_1, %c0_2] : memref<16x96xf32, #tpu.memory_space<vmem>>, vector<16x96xf32>
    %cst = arith.constant dense<0.000000e+00> : vector<8x96xf32>
    %2 = tpu.matmul %0, %1, %cst {dimension_numbers = #tpu.dot_dimension_numbers<[1], [0], [0], [1], [0, 0, 1, 1], [], []>} : vector<8x16xf32>, vector<16x96xf32>, vector<8x96xf32> -> vector<8x96xf32>
    %c0_3 = arith.constant 0 : index
    %c0_4 = arith.constant 0 : index
    %3 = vector.load %arg5[%c0_3, %c0_4] : memref<8x96xf32, #tpu.memory_space<vmem>>, vector<8x96xf32>
    tpu.vector_store %arg5[%c0_3, %c0_4], %2 {strides = array<i32>} : memref<8x96xf32, #tpu.memory_space<vmem>>, vector<8x96xf32>,
    %c0_5 = arith.constant 0 : index
    %c0_6 = arith.constant 0 : index
    %4 = vector.load %arg5[%c0_5, %c0_6] : memref<8x96xf32, #tpu.memory_space<vmem>>, vector<8x96xf32>
    %c0_7 = arith.constant 0 : index
    %c0_8 = arith.constant 0 : index
    %5 = vector.load %arg2[%c0_7, %c0_8] : memref<96x48xf32, #tpu.memory_space<vmem>>, vector<96x48xf32>
    %cst_9 = arith.constant dense<0.000000e+00> : vector<8x48xf32>
    %6 = tpu.matmul %4, %5, %cst_9 {dimension_numbers = #tpu.dot_dimension_numbers<[1], [0], [0], [1], [0, 0, 1, 1], [], []>} : vector<8x96xf32>, vector<96x48xf32>, vector<8x48xf32> -> vector<8x48xf32>
    %c0_10 = arith.constant 0 : index
    %c0_11 = arith.constant 0 : index
    %7 = vector.load %arg4[%c0_10, %c0_11] : memref<8x48xf32, #tpu.memory_space<vmem>>, vector<8x48xf32>
    tpu.vector_store %arg4[%c0_10, %c0_11], %6 {strides = array<i32>} : memref<8x48xf32, #tpu.memory_space<vmem>>, vector<8x48xf32>,
    return
  }
  func.func @transform_0(%arg0: i32) -> (i32, i32) {
    %c0_i32 = arith.constant 0 : i32
    %c0_i32_0 = arith.constant 0 : i32
    %c0_i32_1 = arith.constant 0 : i32
    return %c0_i32, %c0_i32_0 : i32, i32
  }
  func.func @transform_1(%arg0: i32) -> (i32, i32) {
    %c0_i32 = arith.constant 0 : i32
    %c0_i32_0 = arith.constant 0 : i32
    %c0_i32_1 = arith.constant 0 : i32
    return %c0_i32, %c0_i32_0 : i32, i32
  }
  func.func @transform_2(%arg0: i32) -> (i32, i32) {
    %c0_i32 = arith.constant 0 : i32
    %c0_i32_0 = arith.constant 0 : i32
    return %c0_i32, %arg0 : i32, i32
  }
  func.func @transform_3(%arg0: i32) -> (i32, i32) {
    %c0_i32 = arith.constant 0 : i32
    %c0_i32_0 = arith.constant 0 : i32
    return %c0_i32, %arg0 : i32, i32
  }
}

</mosaic_0001>

<llo_original>
// kernel: tv_denoise_forward.1
$region0: #{tv_denoise_forward.1}
  #allocation0 [shape = 'u32[]', space=smem, size = 0x4, offset = 0x4, fixed_abs, tag = 'smem constant byte address 0x4 - core index']
  #allocation1 [shape = 'u32[144,128]{1,0:T(1,128)}', space=vmem, size = 0x12000, scoped, tag = 'internal scratch']
  #allocation2 [shape = 'f32[8,96]{1,0:T(8,128)}', space=vmem, size = 0x1000, scoped, tag = 'scratch operand']
  %s0 = inlined_call_operand.vmem [shape: f32[8,16], index: 0, kind: input, shape index: {}]
  %s1 = inlined_call_operand.vmem [shape: f32[96,48], index: 1, kind: input, shape index: {}]
  %s2 = inlined_call_operand.vmem [shape: f32[16,96], index: 2, kind: input, shape index: {}]
  %s3 = inlined_call_operand.vmem [shape: f32[8,48], index: 3, kind: output, shape index: {}]
  %s4 = sld [smem:[#allocation0]]
  $region22: #{tv_denoise_forward.1} parent=0
    _
  %s6 = ssub.s32 1, %s4
  %s7 = scalar_select 0, %s6, %s4
  // Predicated region
  $region2: #{tv_denoise_forward.1} parent=0 // pred_check
    _
  $region3: #{tv_denoise_forward.1} parent=0 // pred_check_branch
    %9 = sbr.rel (0) target = $region5
  $region4: #{tv_denoise_forward.1} parent=0 // pred_region
    _
  $region5: #{tv_denoise_forward.1} parent=0 // pred_fallthru
    _
  // Predicated region
  $region6: #{tv_denoise_forward.1} parent=0 // pred_check
    _
  $region7: #{tv_denoise_forward.1} parent=0 // pred_check_branch
    %11 = sbr.rel (0) target = $region9
  $region8: #{tv_denoise_forward.1} parent=0 // pred_region
    _
  $region9: #{tv_denoise_forward.1} parent=0 // pred_fallthru
    _
  // Predicated region
  $region10: #{tv_denoise_forward.1} parent=0 // pred_check
    _
  $region11: #{tv_denoise_forward.1} parent=0 // pred_check_branch
    %13 = sbr.rel (0) target = $region13
  $region12: #{tv_denoise_forward.1} parent=0 // pred_region
    _
  $region13: #{tv_denoise_forward.1} parent=0 // pred_fallthru
    _
  %v14 = vld [vmem:[%s0] sm:$0xff]
  %v15 = vld [vmem:[%s2] sm:$0xff]
  %v16 = vld [vmem:[%s2 + $0x8] sm:$0xff]
  %vm17 = vcmask 130048
  %v19 = vsel %vm17, %v14, 0
  %21 = vmatprep.subr.mxu0 0.0
  %22 = vmatpush1.msra.mxu0 0.0
  %23 = vmatprep.subr.mxu0 0.0
  %24 = vmatpush1.msra.mxu0 0.0
  %25 = vmatprep.subr.mxu0 0.0
  %26 = vmatpush1.msra.mxu0 0.0
  %27 = vmatprep.subr.mxu0 0.0
  %28 = vmatpush1.msra.mxu0 0.0
  %29 = vmatprep.subr.mxu0 0.0
  %30 = vmatpush1.msra.mxu0 0.0
  %31 = vmatprep.subr.mxu0 0.0
  %32 = vmatpush1.msra.mxu0 0.0
  %33 = vmatprep.subr.mxu0 0.0
  %34 = vmatpush1.msra.mxu0 0.0
  %35 = vmatprep.subr.mxu0 0.0
  %36 = vmatpush1.msra.mxu0 0.0
  %37 = vmatprep.subr.mxu0 0.0
  %38 = vmatpush1.msra.mxu0 0.0
  %39 = vmatprep.subr.mxu0 0.0
  %40 = vmatpush1.msra.mxu0 0.0
  %41 = vmatprep.subr.mxu0 0.0
  %42 = vmatpush1.msra.mxu0 0.0
  %43 = vmatprep.subr.mxu0 0.0
  %44 = vmatpush1.msra.mxu0 0.0
  %45 = vmatprep.subr.mxu0 0.0
  %46 = vmatpush1.msra.mxu0 0.0
  %47 = vmatprep.subr.mxu0 0.0
  %48 = vmatpush1.msra.mxu0 0.0
  %49 = vmatprep.subr.mxu0 0.0
  %50 = vmatpush1.msra.mxu0 %v16
  %51 = vmatprep.subr.mxu0 0.0
  %52 = vmatpush1.msra.mxu0 %v15
  %53 = vmatprep.subr.mxu0 0.0
  %54 = vmatpush2.msra.mxu0 0.0
  %55 = vmatprep.subr.mxu0 0.0
  %56 = vmatpush2.msra.mxu0 0.0
  %57 = vmatprep.subr.mxu0 0.0
  %58 = vmatpush2.msra.mxu0 0.0
  %59 = vmatprep.subr.mxu0 0.0
  %60 = vmatpush2.msra.mxu0 0.0
  %61 = vmatprep.subr.mxu0 0.0
  %62 = vmatpush2.msra.mxu0 0.0
  %63 = vmatprep.subr.mxu0 0.0
  %64 = vmatpush2.msra.mxu0 0.0
  %65 = vmatprep.subr.mxu0 0.0
  %66 = vmatpush2.msra.mxu0 0.0
  %67 = vmatprep.subr.mxu0 0.0
  %68 = vmatpush2.msra.mxu0 0.0
  %69 = vmatprep.subr.mxu0 0.0
  %70 = vmatpush2.msra.mxu0 0.0
  %71 = vmatprep.subr.mxu0 0.0
  %72 = vmatpush2.msra.mxu0 0.0
  %73 = vmatprep.subr.mxu0 0.0
  %74 = vmatpush2.msra.mxu0 0.0
  %75 = vmatprep.subr.mxu0 0.0
  %76 = vmatpush2.msra.mxu0 0.0
  %77 = vmatprep.subr.mxu0 0.0
  %78 = vmatpush2.msra.mxu0 0.0
  %79 = vmatprep.subr.mxu0 0.0
  %80 = vmatpush2.msra.mxu0 0.0
  %81 = vmatprep.subr.mxu0 0.0
  %82 = vmatpush2.msra.mxu0 0.0
  %83 = vmatprep.subr.mxu0 0.0
  %84 = vmatpush2.msra.mxu0 0.0
  %85 = vmatprep.mubr.f32.mxu0 0.0
  %86 = vmatmul.mubr.f32.gmra.mxu0 %v19
  %v87 = vpop.f32.mrf.mxu0
  %v88 = vadd.f32 0.0, %v87
  %v89 = vpop.f32.mrf.mxu0
  %90 = vdwg.mxu0
  %vm91 = vcmask 785408
  %92 = vst.msk [vmem:[#allocation2] sm:$0xff] %vm91, %v88
  %v93 = vld [vmem:[#allocation2] sm:$0xff]
  %v94 = vld [vmem:[%s1] sm:$0xff]
  %v95 = vld [vmem:[%s1 + $0x8] sm:$0xff]
  %v96 = vld [vmem:[%s1 + $0x10] sm:$0xff]
  %v97 = vld [vmem:[%s1 + $0x18] sm:$0xff]
  %v98 = vld [vmem:[%s1 + $0x20] sm:$0xff]
  %v99 = vld [vmem:[%s1 + $0x28] sm:$0xff]
  %v100 = vld [vmem:[%s1 + $0x30] sm:$0xff]
  %v101 = vld [vmem:[%s1 + $0x38] sm:$0xff]
  %v102 = vld [vmem:[%s1 + $0x40] sm:$0xff]
  %v103 = vld [vmem:[%s1 + $0x48] sm:$0xff]
  %v104 = vld [vmem:[%s1 + $0x50] sm:$0xff]
  %v105 = vld [vmem:[%s1 + $0x58] sm:$0xff]
  %v107 = vsel %vm91, %v93, 0
  %109 = vmatprep.subr.mxu0 0.0
  %110 = vmatpush1.msra.mxu0 0.0
  %111 = vmatprep.subr.mxu0 0.0
  %112 = vmatpush1.msra.mxu0 0.0
  %113 = vmatprep.subr.mxu0 0.0
  %114 = vmatpush1.msra.mxu0 0.0
  %115 = vmatprep.subr.mxu0 0.0
  %116 = vmatpush1.msra.mxu0 0.0
  %117 = vmatprep.subr.mxu0 0.0
  %118 = vmatpush1.msra.mxu0 %v105
  %119 = vmatprep.subr.mxu0 0.0
  %120 = vmatpush1.msra.mxu0 %v104
  %121 = vmatprep.subr.mxu0 0.0
  %122 = vmatpush1.msra.mxu0 %v103
  %123 = vmatprep.subr.mxu0 0.0
  %124 = vmatpush1.msra.mxu0 %v102
  %125 = vmatprep.subr.mxu0 0.0
  %126 = vmatpush1.msra.mxu0 %v101
  %127 = vmatprep.subr.mxu0 0.0
  %128 = vmatpush1.msra.mxu0 %v100
  %129 = vmatprep.subr.mxu0 0.0
  %130 = vmatpush1.msra.mxu0 %v99
  %131 = vmatprep.subr.mxu0 0.0
  %132 = vmatpush1.msra.mxu0 %v98
  %133 = vmatprep.subr.mxu0 0.0
  %134 = vmatpush1.msra.mxu0 %v97
  %135 = vmatprep.subr.mxu0 0.0
  %136 = vmatpush1.msra.mxu0 %v96
  %137 = vmatprep.subr.mxu0 0.0
  %138 = vmatpush1.msra.mxu0 %v95
  %139 = vmatprep.subr.mxu0 0.0
  %140 = vmatpush1.msra.mxu0 %v94
  %141 = vmatprep.subr.mxu0 0.0
  %142 = vmatpush2.msra.mxu0 0.0
  %143 = vmatprep.subr.mxu0 0.0
  %144 = vmatpush2.msra.mxu0 0.0
  %145 = vmatprep.subr.mxu0 0.0
  %146 = vmatpush2.msra.mxu0 0.0
  %147 = vmatprep.subr.mxu0 0.0
  %148 = vmatpush2.msra.mxu0 0.0
  %149 = vmatprep.subr.mxu0 0.0
  %150 = vmatpush2.msra.mxu0 0.0
  %151 = vmatprep.subr.mxu0 0.0
  %152 = vmatpush2.msra.mxu0 0.0
  %153 = vmatprep.subr.mxu0 0.0
  %154 = vmatpush2.msra.mxu0 0.0
  %155 = vmatprep.subr.mxu0 0.0
  %156 = vmatpush2.msra.mxu0 0.0
  %157 = vmatprep.subr.mxu0 0.0
  %158 = vmatpush2.msra.mxu0 0.0
  %159 = vmatprep.subr.mxu0 0.0
  %160 = vmatpush2.msra.mxu0 0.0
  %161 = vmatprep.subr.mxu0 0.0
  %162 = vmatpush2.msra.mxu0 0.0
  %163 = vmatprep.subr.mxu0 0.0
  %164 = vmatpush2.msra.mxu0 0.0
  %165 = vmatprep.subr.mxu0 0.0
  %166 = vmatpush2.msra.mxu0 0.0
  %167 = vmatprep.subr.mxu0 0.0
  %168 = vmatpush2.msra.mxu0 0.0
  %169 = vmatprep.subr.mxu0 0.0
  %170 = vmatpush2.msra.mxu0 0.0
  %171 = vmatprep.subr.mxu0 0.0
  %172 = vmatpush2.msra.mxu0 0.0
  %173 = vmatprep.mubr.f32.mxu0 0.0
  %174 = vmatmul.mubr.f32.gmra.mxu0 %v107
  %v175 = vpop.f32.mrf.mxu0
  %v176 = vadd.f32 0.0, %v175
  %v177 = vpop.f32.mrf.mxu0
  %178 = vdwg.mxu0
  %vm179 = vcmask 392192
  %180 = vst.msk [vmem:[%s3] sm:$0xff] %vm179, %v176
  // Predicated region
  $region14: #{tv_denoise_forward.1} parent=0 // pred_check
    _
  $region15: #{tv_denoise_forward.1} parent=0 // pred_check_branch
    %182 = sbr.rel (0) target = $region17
  $region16: #{tv_denoise_forward.1} parent=0 // pred_region
    _
  $region17: #{tv_denoise_forward.1} parent=0 // pred_fallthru
    _
  // Predicated region
  $region18: #{tv_denoise_forward.1} parent=0 // pred_check
    _
  $region19: #{tv_denoise_forward.1} parent=0 // pred_check_branch
    %184 = sbr.rel (0) target = $region21
  $region20: #{tv_denoise_forward.1} parent=0 // pred_region
    _
  $region21: #{tv_denoise_forward.1} parent=0 // pred_fallthru
    _

</llo_original>
